<compile_context>
chip_gen: v7x
topology: tpu7x:2x2x1
jax: 0.10.0
libtpu: 0.0.40
codegen_flags: <defaults>
</compile_context>

<pallas_src>
import jax
import jax.numpy as jnp
import numpy as np
from jax.experimental import pallas as pl
from jax.experimental.pallas import tpu as pltpu

_LANE = 128
_SUB = 8
_ROW_ALIGN = 16                      # clean sublane tiling for 32- and 16-bit dtypes
_MAX_X_BLOCK_BYTES = 2 * 1024 * 1024  # keep x blocks v7x/VMEM friendly


def _round_up(a, b):
    return (a + b - 1) // b * b


def _dice_partials_kernel(x_ref, y_ref, m_ref, tp_ref, sx_ref, so_ref):
    """Grid = (batch, spatial_tile).

    x_ref : (1, C, R, 128)   net output tile (any float dtype, widened in-kernel)
    y_ref : (1, 1, R, 128)   int32 label map tile
    m_ref : (1, 1, R, 128)   valid-pixel mask tile
    tp_ref/sx_ref/so_ref : (1, C, 8, 128) f32 per-class partial sums of
        x*mask*onehot, x*mask, mask*onehot (accumulated over spatial tiles).
    """
    s = pl.program_id(1)

    @pl.when(s == 0)
    def _init():
        tp_ref[...] = jnp.zeros_like(tp_ref)
        sx_ref[...] = jnp.zeros_like(sx_ref)
        so_ref[...] = jnp.zeros_like(so_ref)

    C = x_ref.shape[1]
    rows = x_ref.shape[2]
    n_chunks = rows // _SUB

    y = y_ref[0, 0]                              # (R, 128) int32
    m = m_ref[0, 0].astype(jnp.float32)          # (R, 128) f32

    def _vsum(a):
        # (R, 128) -> (8, 128): pure vreg-by-vreg adds (VALU only); the
        # cross-lane XLU reduce is deferred to the tiny wrapper-side sum.
        acc = a[0:_SUB, :]
        for i in range(1, n_chunks):
            acc = acc + a[_SUB * i:_SUB * (i + 1), :]
        return acc

    for c in range(C):                           # C is small & static
        xc = x_ref[0, c].astype(jnp.float32)     # (R, 128)
        oh = (y == c)                            # onehot as bool, no broadcast_to
        xm = xc * m                              # x * mask
        tp_ref[0, c] += _vsum(jnp.where(oh, xm, 0.0))   # x * mask * onehot
        sx_ref[0, c] += _vsum(xm)                       # x * mask
        so_ref[0, c] += _vsum(jnp.where(oh, m, 0.0))    # mask * onehot


def masked_soft_dice_loss(x, y, loss_mask=None, class_weight=None, *,
                          smooth=1.0, apply_nonlin=None):
    """JAX/Pallas equivalent of Masked_SoftDiceLoss(batch_dice=False, do_bg=True).

    x          : (B, C, *spatial) float   network output (NCHW / NCDHW)
    y          : (B, 1, *spatial) or (B, *spatial) integer label map
    loss_mask  : (B, 1, *spatial) float (1 valid / 0 invalid) or None
    class_weight : optional (C,) weights (masked-class path of DC_and_CE_loss_Masked)
    returns    : scalar float32 loss
    """
    B, C = x.shape[0], x.shape[1]
    S = 1
    for d in x.shape[2:]:
        S *= d

    if apply_nonlin is not None:
        x = apply_nonlin(x)
    if y.ndim == x.ndim - 1:
        y = y[:, None]

    # Keep native dtypes (bf16 DMAs at half traffic; widened inside the kernel).
    x3 = x.reshape(B, C, S)
    y3 = y.reshape(B, 1, S).astype(jnp.int32)
    if loss_mask is None:
        m3 = jnp.ones((B, 1, S), x.dtype)
    else:
        m3 = loss_mask.reshape(B, 1, S)

    # Fold spatial into (rows, 128); pick tile rows so the x block is ~2 MiB.
    s2 = _round_up(S, _LANE) // _LANE
    rows = _MAX_X_BLOCK_BYTES // (C * _LANE * 4)
    rows = max(_ROW_ALIGN, min(512, rows))
    rows = rows // _ROW_ALIGN * _ROW_ALIGN
    rows = min(rows, _round_up(s2, _ROW_ALIGN))
    s2_pad = _round_up(s2, rows)
    S_pad = s2_pad * _LANE
    num_tiles = s2_pad // rows

    if S_pad != S:
        pad = ((0, 0), (0, 0), (0, S_pad - S))
        x3 = jnp.pad(x3, pad)
        y3 = jnp.pad(y3, pad)
        m3 = jnp.pad(m3, pad)        # zero mask in padding -> no contribution

    x4 = x3.reshape(B, C, s2_pad, _LANE)
    y4 = y3.reshape(B, 1, s2_pad, _LANE)
    m4 = m3.reshape(B, 1, s2_pad, _LANE)

    out_sd = jax.ShapeDtypeStruct((B, C, _SUB, _LANE), jnp.float32)
    out_spec = pl.BlockSpec((1, C, _SUB, _LANE), lambda b, t: (b, 0, 0, 0))

    tp_p, sx_p, so_p = pl.pallas_call(
        _dice_partials_kernel,
        out_shape=(out_sd, out_sd, out_sd),
        grid_spec=pltpu.PrefetchScalarGridSpec(
            num_scalar_prefetch=0,
            grid=(B, num_tiles),
            in_specs=[
                pl.BlockSpec((1, C, rows, _LANE), lambda b, t: (b, 0, t, 0)),
                pl.BlockSpec((1, 1, rows, _LANE), lambda b, t: (b, 0, t, 0)),
                pl.BlockSpec((1, 1, rows, _LANE), lambda b, t: (b, 0, t, 0)),
            ],
            out_specs=(out_spec, out_spec, out_spec),
        ),
        compiler_params=pltpu.CompilerParams(
            dimension_semantics=("parallel", "arbitrary"),
            vmem_limit_bytes=32 * 1024 * 1024,
        ),
    )(x4, y4, m4)

    # Tiny final reduction + dice math on (B, C) scalars, in plain JAX.
    tp = jnp.sum(tp_p, axis=(2, 3))
    fp = jnp.sum(sx_p, axis=(2, 3)) - tp
    fn = jnp.sum(so_p, axis=(2, 3)) - tp
    nominator = 2.0 * tp + smooth
    denominator = 2.0 * tp + fp + fn + smooth
    dc = nominator / (denominator + 1e-8)
    per_bc = 1.0 - dc                                   # (B, C)
    if class_weight is not None:
        cw = jnp.asarray(class_weight, jnp.float32)
        return jnp.sum(per_bc * cw[None, :]) / jnp.sum(cw)
    return jnp.sum(per_bc) / C


def _reference_loss(x, y, loss_mask, smooth=1.0, class_weight=None):
    """Pure-JAX reference mirroring the PyTorch module (label-map gt path)."""
    B, C = x.shape[0], x.shape[1]
    if y.ndim == x.ndim - 1:
        y = y[:, None]
    y_onehot = jax.nn.one_hot(y[:, 0], C, axis=1, dtype=jnp.float32)  # (B,C,H,W)
    m = loss_mask
    axes = tuple(range(2, x.ndim))
    tp = jnp.sum(x * y_onehot * m, axis=axes)
    fp = jnp.sum(x * (1.0 - y_onehot) * m, axis=axes)
    fn = jnp.sum((1.0 - x) * y_onehot * m, axis=axes)
    dc = (2.0 * tp + smooth) / (2.0 * tp + fp + fn + smooth + 1e-8)
    loss = 1.0 - dc
    if class_weight is not None:
        cw = jnp.asarray(class_weight, jnp.float32)
        return jnp.sum(loss * cw[None, :]) / jnp.sum(cw)
    return jnp.sum(loss) / C


if __name__ == "__main__":
    key = jax.random.PRNGKey(0)
    k1, k2, k3 = jax.random.split(key, 3)

    B, C, H, W = 2, 4, 16, 16
    # Network output in [0, 1] (as if softmax/sigmoid already applied); the
    # loss itself does not require it since apply_nonlin=None by default.
    x = jax.nn.sigmoid(jax.random.normal(k1, (B, C, H, W), dtype=jnp.float32))
    y = jax.random.randint(k2, (B, 1, H, W), 0, C, dtype=jnp.int32)
    loss_mask = (jax.random.uniform(k3, (B, 1, H, W)) > 0.3).astype(jnp.float32)

    # Default path (class_weight=None), as in Masked_SoftDiceLoss defaults.
    loss = jax.block_until_ready(masked_soft_dice_loss(x, y, loss_mask, smooth=1.0))
    ref = jax.block_until_ready(_reference_loss(x, y, loss_mask, smooth=1.0))
    np.testing.assert_allclose(np.asarray(loss), np.asarray(ref), rtol=1e-5, atol=1e-5)

    # Masked-class path used by DC_and_CE_loss_Masked (per-class weights).
    cw = jnp.array([0.0, 1.0, 1.0, 0.0], jnp.float32)
    loss_w = jax.block_until_ready(
        masked_soft_dice_loss(x, y, loss_mask, class_weight=cw, smooth=1.0))
    ref_w = jax.block_until_ready(
        _reference_loss(x, y, loss_mask, smooth=1.0, class_weight=cw))
    np.testing.assert_allclose(np.asarray(loss_w), np.asarray(ref_w), rtol=1e-5, atol=1e-5)

    print("KERNEL_OK")
</pallas_src>

<mosaic_0001>
module attributes {stable_mosaic.version = 11 : i64} {
  func.func @_dice_partials_kernel(%arg0: i32, %arg1: i32, %arg2: memref<1x4x16x128xf32, #tpu.memory_space<vmem>>, %arg3: memref<1x1x16x128xi32, #tpu.memory_space<vmem>>, %arg4: memref<1x1x16x128xf32, #tpu.memory_space<vmem>>, %arg5: memref<1x4x8x128xf32, #tpu.memory_space<vmem>>, %arg6: memref<1x4x8x128xf32, #tpu.memory_space<vmem>>, %arg7: memref<1x4x8x128xf32, #tpu.memory_space<vmem>>) attributes {dimension_semantics = [#tpu.dimension_semantics<parallel>, #tpu.dimension_semantics<arbitrary>], iteration_bounds = array<i64: 2, 1>, scalar_prefetch = 0 : i64, scratch_operands = 0 : i64, tpu.core_type = #tpu.core_type<tc>, window_params = [{transform_indices = @transform_0, window_bounds = array<i64: 1, 4, 16, 128>}, {transform_indices = @transform_1, window_bounds = array<i64: 1, 1, 16, 128>}, {transform_indices = @transform_2, window_bounds = array<i64: 1, 1, 16, 128>}, {transform_indices = @transform_3, window_bounds = array<i64: 1, 4, 8, 128>}, {transform_indices = @transform_4, window_bounds = array<i64: 1, 4, 8, 128>}, {transform_indices = @transform_5, window_bounds = array<i64: 1, 4, 8, 128>}]} {
    %c0_i32 = arith.constant 0 : i32
    %0 = arith.cmpi eq, %arg1, %c0_i32 : i32
    %1 = arith.extui %0 : i1 to i32
    %c0_i32_0 = arith.constant 0 : i32
    %2 = arith.cmpi ne, %1, %c0_i32_0 : i32
    scf.if %2 {
      %cst_125 = arith.constant 0.000000e+00 : f32
      %151 = vector.broadcast %cst_125 : f32 to vector<1x4x8x128xf32>
      %c0_126 = arith.constant 0 : index
      %c0_127 = arith.constant 0 : index
      %c0_128 = arith.constant 0 : index
      %c0_129 = arith.constant 0 : index
      %152 = vector.load %arg5[%c0_126, %c0_127, %c0_128, %c0_129] : memref<1x4x8x128xf32, #tpu.memory_space<vmem>>, vector<1x4x8x128xf32>
      tpu.vector_store %arg5[%c0_126, %c0_127, %c0_128, %c0_129], %151 {strides = array<i32>} : memref<1x4x8x128xf32, #tpu.memory_space<vmem>>, vector<1x4x8x128xf32>,
      %cst_130 = arith.constant 0.000000e+00 : f32
      %153 = vector.broadcast %cst_130 : f32 to vector<1x4x8x128xf32>
      %c0_131 = arith.constant 0 : index
      %c0_132 = arith.constant 0 : index
      %c0_133 = arith.constant 0 : index
      %c0_134 = arith.constant 0 : index
      %154 = vector.load %arg6[%c0_131, %c0_132, %c0_133, %c0_134] : memref<1x4x8x128xf32, #tpu.memory_space<vmem>>, vector<1x4x8x128xf32>
      tpu.vector_store %arg6[%c0_131, %c0_132, %c0_133, %c0_134], %153 {strides = array<i32>} : memref<1x4x8x128xf32, #tpu.memory_space<vmem>>, vector<1x4x8x128xf32>,
      %cst_135 = arith.constant 0.000000e+00 : f32
      %155 = vector.broadcast %cst_135 : f32 to vector<1x4x8x128xf32>
      %c0_136 = arith.constant 0 : index
      %c0_137 = arith.constant 0 : index
      %c0_138 = arith.constant 0 : index
      %c0_139 = arith.constant 0 : index
      %156 = vector.load %arg7[%c0_136, %c0_137, %c0_138, %c0_139] : memref<1x4x8x128xf32, #tpu.memory_space<vmem>>, vector<1x4x8x128xf32>
      tpu.vector_store %arg7[%c0_136, %c0_137, %c0_138, %c0_139], %155 {strides = array<i32>} : memref<1x4x8x128xf32, #tpu.memory_space<vmem>>, vector<1x4x8x128xf32>,
    } else {
    }
    %c0 = arith.constant 0 : index
    %c0_1 = arith.constant 0 : index
    %c0_2 = arith.constant 0 : index
    %c0_3 = arith.constant 0 : index
    %3 = vector.load %arg3[%c0, %c0_1, %c0_2, %c0_3] : memref<1x1x16x128xi32, #tpu.memory_space<vmem>>, vector<1x1x16x128xi32>
    %4 = vector.shape_cast %3 : vector<1x1x16x128xi32> to vector<16x128xi32>
    %c0_4 = arith.constant 0 : index
    %c0_5 = arith.constant 0 : index
    %c0_6 = arith.constant 0 : index
    %c0_7 = arith.constant 0 : index
    %5 = vector.load %arg4[%c0_4, %c0_5, %c0_6, %c0_7] : memref<1x1x16x128xf32, #tpu.memory_space<vmem>>, vector<1x1x16x128xf32>
    %6 = vector.shape_cast %5 : vector<1x1x16x128xf32> to vector<16x128xf32>
    %c0_8 = arith.constant 0 : index
    %c0_9 = arith.constant 0 : index
    %c0_10 = arith.constant 0 : index
    %c0_11 = arith.constant 0 : index
    %7 = vector.load %arg2[%c0_8, %c0_9, %c0_10, %c0_11] : memref<1x4x16x128xf32, #tpu.memory_space<vmem>>, vector<1x1x16x128xf32>
    %8 = vector.shape_cast %7 : vector<1x1x16x128xf32> to vector<16x128xf32>
    %c0_i32_12 = arith.constant 0 : i32
    %9 = vector.broadcast %c0_i32_12 : i32 to vector<16x128xi32>
    %10 = arith.cmpi eq, %4, %9 : vector<16x128xi32>
    %11 = arith.mulf %8, %6 : vector<16x128xf32>
    %c0_13 = arith.constant 0 : index
    %c0_14 = arith.constant 0 : index
    %c0_15 = arith.constant 0 : index
    %c0_16 = arith.constant 0 : index
    %12 = vector.load %arg5[%c0_13, %c0_14, %c0_15, %c0_16] : memref<1x4x8x128xf32, #tpu.memory_space<vmem>>, vector<1x1x8x128xf32>
    %13 = vector.shape_cast %12 : vector<1x1x8x128xf32> to vector<8x128xf32>
    %cst = arith.constant 0.000000e+00 : f32
    %14 = vector.broadcast %cst : f32 to vector<16x128xf32>
    %15 = arith.select %10, %11, %14 : vector<16x128xi1>, vector<16x128xf32>
    %16 = vector.extract_strided_slice %15 {offsets = [0, 0], sizes = [8, 128], strides = [1, 1]} : vector<16x128xf32> to vector<8x128xf32>
    %17 = vector.extract_strided_slice %15 {offsets = [8, 0], sizes = [8, 128], strides = [1, 1]} : vector<16x128xf32> to vector<8x128xf32>
    %18 = arith.addf %16, %17 : vector<8x128xf32>
    %19 = arith.addf %13, %18 : vector<8x128xf32>
    %c0_17 = arith.constant 0 : index
    %c0_18 = arith.constant 0 : index
    %c0_19 = arith.constant 0 : index
    %c0_20 = arith.constant 0 : index
    %20 = vector.load %arg5[%c0_17, %c0_18, %c0_19, %c0_20] : memref<1x4x8x128xf32, #tpu.memory_space<vmem>>, vector<1x1x8x128xf32>
    %21 = vector.shape_cast %20 : vector<1x1x8x128xf32> to vector<8x128xf32>
    %22 = vector.shape_cast %19 : vector<8x128xf32> to vector<1x1x8x128xf32>
    tpu.vector_store %arg5[%c0_17, %c0_18, %c0_19, %c0_20], %22 {strides = array<i32>} : memref<1x4x8x128xf32, #tpu.memory_space<vmem>>, vector<1x1x8x128xf32>,
    %c0_21 = arith.constant 0 : index
    %c0_22 = arith.constant 0 : index
    %c0_23 = arith.constant 0 : index
    %c0_24 = arith.constant 0 : index
    %23 = vector.load %arg6[%c0_21, %c0_22, %c0_23, %c0_24] : memref<1x4x8x128xf32, #tpu.memory_space<vmem>>, vector<1x1x8x128xf32>
    %24 = vector.shape_cast %23 : vector<1x1x8x128xf32> to vector<8x128xf32>
    %25 = vector.extract_strided_slice %11 {offsets = [0, 0], sizes = [8, 128], strides = [1, 1]} : vector<16x128xf32> to vector<8x128xf32>
    %26 = vector.extract_strided_slice %11 {offsets = [8, 0], sizes = [8, 128], strides = [1, 1]} : vector<16x128xf32> to vector<8x128xf32>
    %27 = arith.addf %25, %26 : vector<8x128xf32>
    %28 = arith.addf %24, %27 : vector<8x128xf32>
    %c0_25 = arith.constant 0 : index
    %c0_26 = arith.constant 0 : index
    %c0_27 = arith.constant 0 : index
    %c0_28 = arith.constant 0 : index
    %29 = vector.load %arg6[%c0_25, %c0_26, %c0_27, %c0_28] : memref<1x4x8x128xf32, #tpu.memory_space<vmem>>, vector<1x1x8x128xf32>
    %30 = vector.shape_cast %29 : vector<1x1x8x128xf32> to vector<8x128xf32>
    %31 = vector.shape_cast %28 : vector<8x128xf32> to vector<1x1x8x128xf32>
    tpu.vector_store %arg6[%c0_25, %c0_26, %c0_27, %c0_28], %31 {strides = array<i32>} : memref<1x4x8x128xf32, #tpu.memory_space<vmem>>, vector<1x1x8x128xf32>,
    %c0_29 = arith.constant 0 : index
    %c0_30 = arith.constant 0 : index
    %c0_31 = arith.constant 0 : index
    %c0_32 = arith.constant 0 : index
    %32 = vector.load %arg7[%c0_29, %c0_30, %c0_31, %c0_32] : memref<1x4x8x128xf32, #tpu.memory_space<vmem>>, vector<1x1x8x128xf32>
    %33 = vector.shape_cast %32 : vector<1x1x8x128xf32> to vector<8x128xf32>
    %cst_33 = arith.constant 0.000000e+00 : f32
    %34 = vector.broadcast %cst_33 : f32 to vector<16x128xf32>
    %35 = arith.select %10, %6, %34 : vector<16x128xi1>, vector<16x128xf32>
    %36 = vector.extract_strided_slice %35 {offsets = [0, 0], sizes = [8, 128], strides = [1, 1]} : vector<16x128xf32> to vector<8x128xf32>
    %37 = vector.extract_strided_slice %35 {offsets = [8, 0], sizes = [8, 128], strides = [1, 1]} : vector<16x128xf32> to vector<8x128xf32>
    %38 = arith.addf %36, %37 : vector<8x128xf32>
    %39 = arith.addf %33, %38 : vector<8x128xf32>
    %c0_34 = arith.constant 0 : index
    %c0_35 = arith.constant 0 : index
    %c0_36 = arith.constant 0 : index
    %c0_37 = arith.constant 0 : index
    %40 = vector.load %arg7[%c0_34, %c0_35, %c0_36, %c0_37] : memref<1x4x8x128xf32, #tpu.memory_space<vmem>>, vector<1x1x8x128xf32>
    %41 = vector.shape_cast %40 : vector<1x1x8x128xf32> to vector<8x128xf32>
    %42 = vector.shape_cast %39 : vector<8x128xf32> to vector<1x1x8x128xf32>
    tpu.vector_store %arg7[%c0_34, %c0_35, %c0_36, %c0_37], %42 {strides = array<i32>} : memref<1x4x8x128xf32, #tpu.memory_space<vmem>>, vector<1x1x8x128xf32>,
    %c0_38 = arith.constant 0 : index
    %c1 = arith.constant 1 : index
    %c0_39 = arith.constant 0 : index
    %c0_40 = arith.constant 0 : index
    %43 = vector.load %arg2[%c0_38, %c1, %c0_39, %c0_40] : memref<1x4x16x128xf32, #tpu.memory_space<vmem>>, vector<1x1x16x128xf32>
    %44 = vector.shape_cast %43 : vector<1x1x16x128xf32> to vector<16x128xf32>
    %c1_i32 = arith.constant 1 : i32
    %45 = vector.broadcast %c1_i32 : i32 to vector<16x128xi32>
    %46 = arith.cmpi eq, %4, %45 : vector<16x128xi32>
    %47 = arith.mulf %44, %6 : vector<16x128xf32>
    %c0_41 = arith.constant 0 : index
    %c1_42 = arith.constant 1 : index
    %c0_43 = arith.constant 0 : index
    %c0_44 = arith.constant 0 : index
    %48 = vector.load %arg5[%c0_41, %c1_42, %c0_43, %c0_44] : memref<1x4x8x128xf32, #tpu.memory_space<vmem>>, vector<1x1x8x128xf32>
    %49 = vector.shape_cast %48 : vector<1x1x8x128xf32> to vector<8x128xf32>
    %cst_45 = arith.constant 0.000000e+00 : f32
    %50 = vector.broadcast %cst_45 : f32 to vector<16x128xf32>
    %51 = arith.select %46, %47, %50 : vector<16x128xi1>, vector<16x128xf32>
    %52 = vector.extract_strided_slice %51 {offsets = [0, 0], sizes = [8, 128], strides = [1, 1]} : vector<16x128xf32> to vector<8x128xf32>
    %53 = vector.extract_strided_slice %51 {offsets = [8, 0], sizes = [8, 128], strides = [1, 1]} : vector<16x128xf32> to vector<8x128xf32>
    %54 = arith.addf %52, %53 : vector<8x128xf32>
    %55 = arith.addf %49, %54 : vector<8x128xf32>
    %c0_46 = arith.constant 0 : index
    %c1_47 = arith.constant 1 : index
    %c0_48 = arith.constant 0 : index
    %c0_49 = arith.constant 0 : index
    %56 = vector.load %arg5[%c0_46, %c1_47, %c0_48, %c0_49] : memref<1x4x8x128xf32, #tpu.memory_space<vmem>>, vector<1x1x8x128xf32>
    %57 = vector.shape_cast %56 : vector<1x1x8x128xf32> to vector<8x128xf32>
    %58 = vector.shape_cast %55 : vector<8x128xf32> to vector<1x1x8x128xf32>
    tpu.vector_store %arg5[%c0_46, %c1_47, %c0_48, %c0_49], %58 {strides = array<i32>} : memref<1x4x8x128xf32, #tpu.memory_space<vmem>>, vector<1x1x8x128xf32>,
    %c0_50 = arith.constant 0 : index
    %c1_51 = arith.constant 1 : index
    %c0_52 = arith.constant 0 : index
    %c0_53 = arith.constant 0 : index
    %59 = vector.load %arg6[%c0_50, %c1_51, %c0_52, %c0_53] : memref<1x4x8x128xf32, #tpu.memory_space<vmem>>, vector<1x1x8x128xf32>
    %60 = vector.shape_cast %59 : vector<1x1x8x128xf32> to vector<8x128xf32>
    %61 = vector.extract_strided_slice %47 {offsets = [0, 0], sizes = [8, 128], strides = [1, 1]} : vector<16x128xf32> to vector<8x128xf32>
    %62 = vector.extract_strided_slice %47 {offsets = [8, 0], sizes = [8, 128], strides = [1, 1]} : vector<16x128xf32> to vector<8x128xf32>
    %63 = arith.addf %61, %62 : vector<8x128xf32>
    %64 = arith.addf %60, %63 : vector<8x128xf32>
    %c0_54 = arith.constant 0 : index
    %c1_55 = arith.constant 1 : index
    %c0_56 = arith.constant 0 : index
    %c0_57 = arith.constant 0 : index
    %65 = vector.load %arg6[%c0_54, %c1_55, %c0_56, %c0_57] : memref<1x4x8x128xf32, #tpu.memory_space<vmem>>, vector<1x1x8x128xf32>
    %66 = vector.shape_cast %65 : vector<1x1x8x128xf32> to vector<8x128xf32>
    %67 = vector.shape_cast %64 : vector<8x128xf32> to vector<1x1x8x128xf32>
    tpu.vector_store %arg6[%c0_54, %c1_55, %c0_56, %c0_57], %67 {strides = array<i32>} : memref<1x4x8x128xf32, #tpu.memory_space<vmem>>, vector<1x1x8x128xf32>,
    %c0_58 = arith.constant 0 : index
    %c1_59 = arith.constant 1 : index
    %c0_60 = arith.constant 0 : index
    %c0_61 = arith.constant 0 : index
    %68 = vector.load %arg7[%c0_58, %c1_59, %c0_60, %c0_61] : memref<1x4x8x128xf32, #tpu.memory_space<vmem>>, vector<1x1x8x128xf32>
    %69 = vector.shape_cast %68 : vector<1x1x8x128xf32> to vector<8x128xf32>
    %cst_62 = arith.constant 0.000000e+00 : f32
    %70 = vector.broadcast %cst_62 : f32 to vector<16x128xf32>
    %71 = arith.select %46, %6, %70 : vector<16x128xi1>, vector<16x128xf32>
    %72 = vector.extract_strided_slice %71 {offsets = [0, 0], sizes = [8, 128], strides = [1, 1]} : vector<16x128xf32> to vector<8x128xf32>
    %73 = vector.extract_strided_slice %71 {offsets = [8, 0], sizes = [8, 128], strides = [1, 1]} : vector<16x128xf32> to vector<8x128xf32>
    %74 = arith.addf %72, %73 : vector<8x128xf32>
    %75 = arith.addf %69, %74 : vector<8x128xf32>
    %c0_63 = arith.constant 0 : index
    %c1_64 = arith.constant 1 : index
    %c0_65 = arith.constant 0 : index
    %c0_66 = arith.constant 0 : index
    %76 = vector.load %arg7[%c0_63, %c1_64, %c0_65, %c0_66] : memref<1x4x8x128xf32, #tpu.memory_space<vmem>>, vector<1x1x8x128xf32>
    %77 = vector.shape_cast %76 : vector<1x1x8x128xf32> to vector<8x128xf32>
    %78 = vector.shape_cast %75 : vector<8x128xf32> to vector<1x1x8x128xf32>
    tpu.vector_store %arg7[%c0_63, %c1_64, %c0_65, %c0_66], %78 {strides = array<i32>} : memref<1x4x8x128xf32, #tpu.memory_space<vmem>>, vector<1x1x8x128xf32>,
    %c0_67 = arith.constant 0 : index
    %c2 = arith.constant 2 : index
    %c0_68 = arith.constant 0 : index
    %c0_69 = arith.constant 0 : index
    %79 = vector.load %arg2[%c0_67, %c2, %c0_68, %c0_69] : memref<1x4x16x128xf32, #tpu.memory_space<vmem>>, vector<1x1x16x128xf32>
    %80 = vector.shape_cast %79 : vector<1x1x16x128xf32> to vector<16x128xf32>
    %c2_i32 = arith.constant 2 : i32
    %81 = vector.broadcast %c2_i32 : i32 to vector<16x128xi32>
    %82 = arith.cmpi eq, %4, %81 : vector<16x128xi32>
    %83 = arith.mulf %80, %6 : vector<16x128xf32>
    %c0_70 = arith.constant 0 : index
    %c2_71 = arith.constant 2 : index
    %c0_72 = arith.constant 0 : index
    %c0_73 = arith.constant 0 : index
    %84 = vector.load %arg5[%c0_70, %c2_71, %c0_72, %c0_73] : memref<1x4x8x128xf32, #tpu.memory_space<vmem>>, vector<1x1x8x128xf32>
    %85 = vector.shape_cast %84 : vector<1x1x8x128xf32> to vector<8x128xf32>
    %cst_74 = arith.constant 0.000000e+00 : f32
    %86 = vector.broadcast %cst_74 : f32 to vector<16x128xf32>
    %87 = arith.select %82, %83, %86 : vector<16x128xi1>, vector<16x128xf32>
    %88 = vector.extract_strided_slice %87 {offsets = [0, 0], sizes = [8, 128], strides = [1, 1]} : vector<16x128xf32> to vector<8x128xf32>
    %89 = vector.extract_strided_slice %87 {offsets = [8, 0], sizes = [8, 128], strides = [1, 1]} : vector<16x128xf32> to vector<8x128xf32>
    %90 = arith.addf %88, %89 : vector<8x128xf32>
    %91 = arith.addf %85, %90 : vector<8x128xf32>
    %c0_75 = arith.constant 0 : index
    %c2_76 = arith.constant 2 : index
    %c0_77 = arith.constant 0 : index
    %c0_78 = arith.constant 0 : index
    %92 = vector.load %arg5[%c0_75, %c2_76, %c0_77, %c0_78] : memref<1x4x8x128xf32, #tpu.memory_space<vmem>>, vector<1x1x8x128xf32>
    %93 = vector.shape_cast %92 : vector<1x1x8x128xf32> to vector<8x128xf32>
    %94 = vector.shape_cast %91 : vector<8x128xf32> to vector<1x1x8x128xf32>
    tpu.vector_store %arg5[%c0_75, %c2_76, %c0_77, %c0_78], %94 {strides = array<i32>} : memref<1x4x8x128xf32, #tpu.memory_space<vmem>>, vector<1x1x8x128xf32>,
    %c0_79 = arith.constant 0 : index
    %c2_80 = arith.constant 2 : index
    %c0_81 = arith.constant 0 : index
    %c0_82 = arith.constant 0 : index
    %95 = vector.load %arg6[%c0_79, %c2_80, %c0_81, %c0_82] : memref<1x4x8x128xf32, #tpu.memory_space<vmem>>, vector<1x1x8x128xf32>
    %96 = vector.shape_cast %95 : vector<1x1x8x128xf32> to vector<8x128xf32>
    %97 = vector.extract_strided_slice %83 {offsets = [0, 0], sizes = [8, 128], strides = [1, 1]} : vector<16x128xf32> to vector<8x128xf32>
    %98 = vector.extract_strided_slice %83 {offsets = [8, 0], sizes = [8, 128], strides = [1, 1]} : vector<16x128xf32> to vector<8x128xf32>
    %99 = arith.addf %97, %98 : vector<8x128xf32>
    %100 = arith.addf %96, %99 : vector<8x128xf32>
    %c0_83 = arith.constant 0 : index
    %c2_84 = arith.constant 2 : index
    %c0_85 = arith.constant 0 : index
    %c0_86 = arith.constant 0 : index
    %101 = vector.load %arg6[%c0_83, %c2_84, %c0_85, %c0_86] : memref<1x4x8x128xf32, #tpu.memory_space<vmem>>, vector<1x1x8x128xf32>
    %102 = vector.shape_cast %101 : vector<1x1x8x128xf32> to vector<8x128xf32>
    %103 = vector.shape_cast %100 : vector<8x128xf32> to vector<1x1x8x128xf32>
    tpu.vector_store %arg6[%c0_83, %c2_84, %c0_85, %c0_86], %103 {strides = array<i32>} : memref<1x4x8x128xf32, #tpu.memory_space<vmem>>, vector<1x1x8x128xf32>,
    %c0_87 = arith.constant 0 : index
    %c2_88 = arith.constant 2 : index
    %c0_89 = arith.constant 0 : index
    %c0_90 = arith.constant 0 : index
    %104 = vector.load %arg7[%c0_87, %c2_88, %c0_89, %c0_90] : memref<1x4x8x128xf32, #tpu.memory_space<vmem>>, vector<1x1x8x128xf32>
    %105 = vector.shape_cast %104 : vector<1x1x8x128xf32> to vector<8x128xf32>
    %cst_91 = arith.constant 0.000000e+00 : f32
    %106 = vector.broadcast %cst_91 : f32 to vector<16x128xf32>
    %107 = arith.select %82, %6, %106 : vector<16x128xi1>, vector<16x128xf32>
    %108 = vector.extract_strided_slice %107 {offsets = [0, 0], sizes = [8, 128], strides = [1, 1]} : vector<16x128xf32> to vector<8x128xf32>
    %109 = vector.extract_strided_slice %107 {offsets = [8, 0], sizes = [8, 128], strides = [1, 1]} : vector<16x128xf32> to vector<8x128xf32>
    %110 = arith.addf %108, %109 : vector<8x128xf32>
    %111 = arith.addf %105, %110 : vector<8x128xf32>
    %c0_92 = arith.constant 0 : index
    %c2_93 = arith.constant 2 : index
    %c0_94 = arith.constant 0 : index
    %c0_95 = arith.constant 0 : index
    %112 = vector.load %arg7[%c0_92, %c2_93, %c0_94, %c0_95] : memref<1x4x8x128xf32, #tpu.memory_space<vmem>>, vector<1x1x8x128xf32>
    %113 = vector.shape_cast %112 : vector<1x1x8x128xf32> to vector<8x128xf32>
    %114 = vector.shape_cast %111 : vector<8x128xf32> to vector<1x1x8x128xf32>
    tpu.vector_store %arg7[%c0_92, %c2_93, %c0_94, %c0_95], %114 {strides = array<i32>} : memref<1x4x8x128xf32, #tpu.memory_space<vmem>>, vector<1x1x8x128xf32>,
    %c0_96 = arith.constant 0 : index
    %c3 = arith.constant 3 : index
    %c0_97 = arith.constant 0 : index
    %c0_98 = arith.constant 0 : index
    %115 = vector.load %arg2[%c0_96, %c3, %c0_97, %c0_98] : memref<1x4x16x128xf32, #tpu.memory_space<vmem>>, vector<1x1x16x128xf32>
    %116 = vector.shape_cast %115 : vector<1x1x16x128xf32> to vector<16x128xf32>
    %c3_i32 = arith.constant 3 : i32
    %117 = vector.broadcast %c3_i32 : i32 to vector<16x128xi32>
    %118 = arith.cmpi eq, %4, %117 : vector<16x128xi32>
    %119 = arith.mulf %116, %6 : vector<16x128xf32>
    %c0_99 = arith.constant 0 : index
    %c3_100 = arith.constant 3 : index
    %c0_101 = arith.constant 0 : index
    %c0_102 = arith.constant 0 : index
    %120 = vector.load %arg5[%c0_99, %c3_100, %c0_101, %c0_102] : memref<1x4x8x128xf32, #tpu.memory_space<vmem>>, vector<1x1x8x128xf32>
    %121 = vector.shape_cast %120 : vector<1x1x8x128xf32> to vector<8x128xf32>
    %cst_103 = arith.constant 0.000000e+00 : f32
    %122 = vector.broadcast %cst_103 : f32 to vector<16x128xf32>
    %123 = arith.select %118, %119, %122 : vector<16x128xi1>, vector<16x128xf32>
    %124 = vector.extract_strided_slice %123 {offsets = [0, 0], sizes = [8, 128], strides = [1, 1]} : vector<16x128xf32> to vector<8x128xf32>
    %125 = vector.extract_strided_slice %123 {offsets = [8, 0], sizes = [8, 128], strides = [1, 1]} : vector<16x128xf32> to vector<8x128xf32>
    %126 = arith.addf %124, %125 : vector<8x128xf32>
    %127 = arith.addf %121, %126 : vector<8x128xf32>
    %c0_104 = arith.constant 0 : index
    %c3_105 = arith.constant 3 : index
    %c0_106 = arith.constant 0 : index
    %c0_107 = arith.constant 0 : index
    %128 = vector.load %arg5[%c0_104, %c3_105, %c0_106, %c0_107] : memref<1x4x8x128xf32, #tpu.memory_space<vmem>>, vector<1x1x8x128xf32>
    %129 = vector.shape_cast %128 : vector<1x1x8x128xf32> to vector<8x128xf32>
    %130 = vector.shape_cast %127 : vector<8x128xf32> to vector<1x1x8x128xf32>
    tpu.vector_store %arg5[%c0_104, %c3_105, %c0_106, %c0_107], %130 {strides = array<i32>} : memref<1x4x8x128xf32, #tpu.memory_space<vmem>>, vector<1x1x8x128xf32>,
    %c0_108 = arith.constant 0 : index
    %c3_109 = arith.constant 3 : index
    %c0_110 = arith.constant 0 : index
    %c0_111 = arith.constant 0 : index
    %131 = vector.load %arg6[%c0_108, %c3_109, %c0_110, %c0_111] : memref<1x4x8x128xf32, #tpu.memory_space<vmem>>, vector<1x1x8x128xf32>
    %132 = vector.shape_cast %131 : vector<1x1x8x128xf32> to vector<8x128xf32>
    %133 = vector.extract_strided_slice %119 {offsets = [0, 0], sizes = [8, 128], strides = [1, 1]} : vector<16x128xf32> to vector<8x128xf32>
    %134 = vector.extract_strided_slice %119 {offsets = [8, 0], sizes = [8, 128], strides = [1, 1]} : vector<16x128xf32> to vector<8x128xf32>
    %135 = arith.addf %133, %134 : vector<8x128xf32>
    %136 = arith.addf %132, %135 : vector<8x128xf32>
    %c0_112 = arith.constant 0 : index
    %c3_113 = arith.constant 3 : index
    %c0_114 = arith.constant 0 : index
    %c0_115 = arith.constant 0 : index
    %137 = vector.load %arg6[%c0_112, %c3_113, %c0_114, %c0_115] : memref<1x4x8x128xf32, #tpu.memory_space<vmem>>, vector<1x1x8x128xf32>
    %138 = vector.shape_cast %137 : vector<1x1x8x128xf32> to vector<8x128xf32>
    %139 = vector.shape_cast %136 : vector<8x128xf32> to vector<1x1x8x128xf32>
    tpu.vector_store %arg6[%c0_112, %c3_113, %c0_114, %c0_115], %139 {strides = array<i32>} : memref<1x4x8x128xf32, #tpu.memory_space<vmem>>, vector<1x1x8x128xf32>,
    %c0_116 = arith.constant 0 : index
    %c3_117 = arith.constant 3 : index
    %c0_118 = arith.constant 0 : index
    %c0_119 = arith.constant 0 : index
    %140 = vector.load %arg7[%c0_116, %c3_117, %c0_118, %c0_119] : memref<1x4x8x128xf32, #tpu.memory_space<vmem>>, vector<1x1x8x128xf32>
    %141 = vector.shape_cast %140 : vector<1x1x8x128xf32> to vector<8x128xf32>
    %cst_120 = arith.constant 0.000000e+00 : f32
    %142 = vector.broadcast %cst_120 : f32 to vector<16x128xf32>
    %143 = arith.select %118, %6, %142 : vector<16x128xi1>, vector<16x128xf32>
    %144 = vector.extract_strided_slice %143 {offsets = [0, 0], sizes = [8, 128], strides = [1, 1]} : vector<16x128xf32> to vector<8x128xf32>
    %145 = vector.extract_strided_slice %143 {offsets = [8, 0], sizes = [8, 128], strides = [1, 1]} : vector<16x128xf32> to vector<8x128xf32>
    %146 = arith.addf %144, %145 : vector<8x128xf32>
    %147 = arith.addf %141, %146 : vector<8x128xf32>
    %c0_121 = arith.constant 0 : index
    %c3_122 = arith.constant 3 : index
    %c0_123 = arith.constant 0 : index
    %c0_124 = arith.constant 0 : index
    %148 = vector.load %arg7[%c0_121, %c3_122, %c0_123, %c0_124] : memref<1x4x8x128xf32, #tpu.memory_space<vmem>>, vector<1x1x8x128xf32>
    %149 = vector.shape_cast %148 : vector<1x1x8x128xf32> to vector<8x128xf32>
    %150 = vector.shape_cast %147 : vector<8x128xf32> to vector<1x1x8x128xf32>
    tpu.vector_store %arg7[%c0_121, %c3_122, %c0_123, %c0_124], %150 {strides = array<i32>} : memref<1x4x8x128xf32, #tpu.memory_space<vmem>>, vector<1x1x8x128xf32>,
    return
  }
  func.func @transform_0(%arg0: i32, %arg1: i32) -> (i32, i32, i32, i32) {
    %c0_i32 = arith.constant 0 : i32
    %c0_i32_0 = arith.constant 0 : i32
    %c0_i32_1 = arith.constant 0 : i32
    return %arg0, %c0_i32, %arg1, %c0_i32_0 : i32, i32, i32, i32
  }
  func.func @transform_1(%arg0: i32, %arg1: i32) -> (i32, i32, i32, i32) {
    %c0_i32 = arith.constant 0 : i32
    %c0_i32_0 = arith.constant 0 : i32
    %c0_i32_1 = arith.constant 0 : i32
    return %arg0, %c0_i32, %arg1, %c0_i32_0 : i32, i32, i32, i32
  }
  func.func @transform_2(%arg0: i32, %arg1: i32) -> (i32, i32, i32, i32) {
    %c0_i32 = arith.constant 0 : i32
    %c0_i32_0 = arith.constant 0 : i32
    %c0_i32_1 = arith.constant 0 : i32
    return %arg0, %c0_i32, %arg1, %c0_i32_0 : i32, i32, i32, i32
  }
  func.func @transform_3(%arg0: i32, %arg1: i32) -> (i32, i32, i32, i32) {
    %c0_i32 = arith.constant 0 : i32
    %c0_i32_0 = arith.constant 0 : i32
    %c0_i32_1 = arith.constant 0 : i32
    %c0_i32_2 = arith.constant 0 : i32
    return %arg0, %c0_i32, %c0_i32_0, %c0_i32_1 : i32, i32, i32, i32
  }
  func.func @transform_4(%arg0: i32, %arg1: i32) -> (i32, i32, i32, i32) {
    %c0_i32 = arith.constant 0 : i32
    %c0_i32_0 = arith.constant 0 : i32
    %c0_i32_1 = arith.constant 0 : i32
    %c0_i32_2 = arith.constant 0 : i32
    return %arg0, %c0_i32, %c0_i32_0, %c0_i32_1 : i32, i32, i32, i32
  }
  func.func @transform_5(%arg0: i32, %arg1: i32) -> (i32, i32, i32, i32) {
    %c0_i32 = arith.constant 0 : i32
    %c0_i32_0 = arith.constant 0 : i32
    %c0_i32_1 = arith.constant 0 : i32
    %c0_i32_2 = arith.constant 0 : i32
    return %arg0, %c0_i32, %c0_i32_0, %c0_i32_1 : i32, i32, i32, i32
  }
}

</mosaic_0001>

<llo_original>
// kernel: tpu_custom_call.1
$region0: #{tpu_custom_call.1}
  #allocation0 [shape = 'u32[]', space=smem, size = 0x4, offset = 0x4, fixed_abs, tag = 'smem constant byte address 0x4 - core index']
  #allocation1 [shape = 'u32[144,128]{1,0:T(1,128)}', space=vmem, size = 0x12000, scoped, tag = 'internal scratch']
  %s0 = inlined_call_operand.hbm [shape: f32[2,4,16,128], index: 0, kind: input, shape index: {}]
  %s1 = inlined_call_operand.hbm [shape: s32[2,1,16,128], index: 1, kind: input, shape index: {}]
  %s2 = inlined_call_operand.hbm [shape: f32[2,1,16,128], index: 2, kind: input, shape index: {}]
  %s3 = inlined_call_operand.hbm [shape: f32[2,4,8,128], index: 3, kind: output, shape index: {0}]
  %s4 = inlined_call_operand.hbm [shape: f32[2,4,8,128], index: 4, kind: output, shape index: {1}]
  %s5 = inlined_call_operand.hbm [shape: f32[2,4,8,128], index: 5, kind: output, shape index: {2}]
  %6 = xla_tuple %s3, %s4, %s5
  %s7 = sld [smem:[#allocation0]]
  $region77: #{tpu_custom_call.1} parent=0
    _
  %s9 = ssub.s32 1, %s7
  %s10 = scalar_select 0, %s9, %s7
  $region1: #{tpu_custom_call.1} parent=0
    #allocation2 [shape = 'u8[65536]{0}', space=vmem, size = 0x10000, scoped, tag = 'input window, operand 0']
    #allocation3 [shape = 's32[2]{0}', space=sflag, size = 0x8, scoped, tag = 'scoped memory for tpu_custom_call.1']
    #allocation4 [shape = 's32[2]{0}', space=sflag, size = 0x8, scoped, tag = 'scoped memory for tpu_custom_call.1']
    #allocation5 [shape = 'u8[16384]{0}', space=vmem, size = 0x4000, scoped, tag = 'input window, operand 1']
    #allocation6 [shape = 's32[2]{0}', space=sflag, size = 0x8, scoped, tag = 'scoped memory for tpu_custom_call.1']
    #allocation7 [shape = 'u8[16384]{0}', space=vmem, size = 0x4000, scoped, tag = 'input window, operand 2']
    #allocation8 [shape = 'u8[32768]{0}', space=vmem, size = 0x8000, scoped, tag = 'output window, operand 0']
    #allocation9 [shape = 'u8[32768]{0}', space=vmem, size = 0x8000, scoped, tag = 'output window, operand 1']
    #allocation10 [shape = 's32[2]{0}', space=sflag, size = 0x8, scoped, tag = 'scoped memory for tpu_custom_call.1']
    #allocation11 [shape = 'u8[32768]{0}', space=vmem, size = 0x8000, scoped, tag = 'output window, operand 2']
    %11 = vsyncpa [#allocation3], 0
    %s12 = scalar_lea.sflag [#allocation3], 1
    %13 = vsyncpa %s12, 0
    %14 = vsyncpa [#allocation6], 0
    %s15 = scalar_lea.sflag [#allocation6], 1
    %16 = vsyncpa %s15, 0
    %17 = vsyncpa [#allocation4], 0
    %s18 = scalar_lea.sflag [#allocation4], 1
    %19 = vsyncpa %s18, 0
    %20 = vsyncpa [#allocation10], 0
    %s21 = scalar_lea.sflag [#allocation10], 1
    %22 = vsyncpa %s21, 0
    loop: start=0, step=1, limit=4
    $region2: #{tpu_custom_call.1} parent=1 // loop_pre_header
      _
    $region3: #{tpu_custom_call.1} parent=1 // loop_header
      %s24 = sphi 0, %s28
      %p25 = scmp.ge.s32.totalorder %s24, 4
      %s31 = sphi 0, %s43
      %s32 = sphi 0, %s39
      %s33 = sphi 0, %s31
      %s34 = sphi 0, %s32
      %s35 = sphi 0, %s33
      %s36 = sphi 0, %s34
      %s48 = sphi 0, %s50
      %s51 = sphi 0, %s48
      %s52 = sphi 0, %s51
      %s68 = sphi 0, %s52
      %s76 = sphi 0, %s78
      %s79 = sphi 0, %s76
      %s80 = sphi 0, %s79
      %s96 = sphi 0, %s80
      %s104 = sphi 0, %s106
      %s107 = sphi 0, %s104
      %s108 = sphi 0, %s107
      %s124 = sphi 0, %s108
      %s130 = sphi 0, %s132
      %s133 = sphi 0, %s130
      %s134 = sphi 0, %s133
      %s150 = sphi 0, %s134
      %s156 = sphi 0, %s158
      %s159 = sphi 0, %s156
      %s160 = sphi 0, %s159
      %s176 = sphi 0, %s160
      %s182 = sphi 0, %s184
      %s185 = sphi 0, %s182
      %s186 = sphi 0, %s185
      %s202 = sphi 0, %s186
    $region4: #{tpu_custom_call.1} parent=1 // loop_header_branch
      %27 = sbr.rel (%p25) target = $region8
    $region5: #{tpu_custom_call.1} parent=1 // loop_body
      %s29 = ssub.s32 %s24, 1
      %s30 = ssub.s32 %s24, 2
      %s37 = sadd.s32 1, %s32
      %p38 = scmp.ge.s32.totalorder %s37, 1
      %s39 = scalar_select %p38, 0, %s37
      %s40 = sadd.s32 1, %s31
      %s41 = scalar_select %p38, %s40, %s31
      %p42 = scmp.ge.s32.totalorder %s41, 2
      %s43 = scalar_select %p42, 0, %s41
      %s44 = ssub.s32 %s31, %s43
      %s45 = ssub.s32 %s32, %s39
      %s46 = sor.u32 %s44, %s45
      %p47 = scmp.eq.s32.totalorder %s46, 0
      %s49 = sadd.s32 %s48, 1
      %s50 = scalar_select %p47, %s48, %s49
      %p53 = pneg %p47
      %p54 = scmp.eq.s32.totalorder %s24, 1
      %p55 = por %p53, %p54
      %p56 = scmp.ne.s32.totalorder %s48, %s51
      %p57 = scmp.eq.s32.totalorder %s24, 0
      %p58 = por %p56, %p57
      %p59 = scmp.ne.s32.totalorder %s48, %s51
      %p60 = scmp.eq.s32.totalorder %s29, 1
      %p61 = por %p59, %p60
      %p62 = scmp.ne.s32.totalorder %s51, %s52
      %p63 = scmp.eq.s32.totalorder %s29, 0
      %p64 = por %p62, %p63
      %p65 = scmp.ne.s32.totalorder %s51, %s52
      %p66 = scmp.eq.s32.totalorder %s30, 1
      %p67 = por %p65, %p66
      %p69 = scmp.ne.s32.totalorder %s52, %s68
      %p70 = scmp.eq.s32.totalorder %s30, 0
      %p71 = por %p69, %p70
      %s72 = ssub.s32 %s31, %s43
      %s73 = ssub.s32 %s32, %s39
      %s74 = sor.u32 %s72, %s73
      %p75 = scmp.eq.s32.totalorder %s74, 0
      %s77 = sadd.s32 %s76, 1
      %s78 = scalar_select %p75, %s76, %s77
      %p81 = pneg %p75
      %p82 = scmp.eq.s32.totalorder %s24, 1
      %p83 = por %p81, %p82
      %p84 = scmp.ne.s32.totalorder %s76, %s79
      %p85 = scmp.eq.s32.totalorder %s24, 0
      %p86 = por %p84, %p85
      %p87 = scmp.ne.s32.totalorder %s76, %s79
      %p88 = scmp.eq.s32.totalorder %s29, 1
      %p89 = por %p87, %p88
      %p90 = scmp.ne.s32.totalorder %s79, %s80
      %p91 = scmp.eq.s32.totalorder %s29, 0
      %p92 = por %p90, %p91
      %p93 = scmp.ne.s32.totalorder %s79, %s80
      %p94 = scmp.eq.s32.totalorder %s30, 1
      %p95 = por %p93, %p94
      %p97 = scmp.ne.s32.totalorder %s80, %s96
      %p98 = scmp.eq.s32.totalorder %s30, 0
      %p99 = por %p97, %p98
      %s100 = ssub.s32 %s31, %s43
      %s101 = ssub.s32 %s32, %s39
      %s102 = sor.u32 %s100, %s101
      %p103 = scmp.eq.s32.totalorder %s102, 0
      %s105 = sadd.s32 %s104, 1
      %s106 = scalar_select %p103, %s104, %s105
      %p109 = pneg %p103
      %p110 = scmp.eq.s32.totalorder %s24, 1
      %p111 = por %p109, %p110
      %p112 = scmp.ne.s32.totalorder %s104, %s107
      %p113 = scmp.eq.s32.totalorder %s24, 0
      %p114 = por %p112, %p113
      %p115 = scmp.ne.s32.totalorder %s104, %s107
      %p116 = scmp.eq.s32.totalorder %s29, 1
      %p117 = por %p115, %p116
      %p118 = scmp.ne.s32.totalorder %s107, %s108
      %p119 = scmp.eq.s32.totalorder %s29, 0
      %p120 = por %p118, %p119
      %p121 = scmp.ne.s32.totalorder %s107, %s108
      %p122 = scmp.eq.s32.totalorder %s30, 1
      %p123 = por %p121, %p122
      %p125 = scmp.ne.s32.totalorder %s108, %s124
      %p126 = scmp.eq.s32.totalorder %s30, 0
      %p127 = por %p125, %p126
      %s128 = ssub.s32 %s31, %s43
      %p129 = scmp.eq.s32.totalorder %s128, 0
      %s131 = sadd.s32 %s130, 1
      %s132 = scalar_select %p129, %s130, %s131
      %p135 = pneg %p129
      %p136 = scmp.eq.s32.totalorder %s24, 1
      %p137 = por %p135, %p136
      %p138 = scmp.ne.s32.totalorder %s130, %s133
      %p139 = scmp.eq.s32.totalorder %s24, 0
      %p140 = por %p138, %p139
      %p141 = scmp.ne.s32.totalorder %s130, %s133
      %p142 = scmp.eq.s32.totalorder %s29, 1
      %p143 = por %p141, %p142
      %p144 = scmp.ne.s32.totalorder %s133, %s134
      %p145 = scmp.eq.s32.totalorder %s29, 0
      %p146 = por %p144, %p145
      %p147 = scmp.ne.s32.totalorder %s133, %s134
      %p148 = scmp.eq.s32.totalorder %s30, 1
      %p149 = por %p147, %p148
      %p151 = scmp.ne.s32.totalorder %s134, %s150
      %p152 = scmp.eq.s32.totalorder %s30, 0
      %p153 = por %p151, %p152
      %s154 = ssub.s32 %s31, %s43
      %p155 = scmp.eq.s32.totalorder %s154, 0
      %s157 = sadd.s32 %s156, 1
      %s158 = scalar_select %p155, %s156, %s157
      %p161 = pneg %p155
      %p162 = scmp.eq.s32.totalorder %s24, 1
      %p163 = por %p161, %p162
      %p164 = scmp.ne.s32.totalorder %s156, %s159
      %p165 = scmp.eq.s32.totalorder %s24, 0
      %p166 = por %p164, %p165
      %p167 = scmp.ne.s32.totalorder %s156, %s159
      %p168 = scmp.eq.s32.totalorder %s29, 1
      %p169 = por %p167, %p168
      %p170 = scmp.ne.s32.totalorder %s159, %s160
      %p171 = scmp.eq.s32.totalorder %s29, 0
      %p172 = por %p170, %p171
      %p173 = scmp.ne.s32.totalorder %s159, %s160
      %p174 = scmp.eq.s32.totalorder %s30, 1
      %p175 = por %p173, %p174
      %p177 = scmp.ne.s32.totalorder %s160, %s176
      %p178 = scmp.eq.s32.totalorder %s30, 0
      %p179 = por %p177, %p178
      %s180 = ssub.s32 %s31, %s43
      %p181 = scmp.eq.s32.totalorder %s180, 0
      %s183 = sadd.s32 %s182, 1
      %s184 = scalar_select %p181, %s182, %s183
      %p187 = pneg %p181
      %p188 = scmp.eq.s32.totalorder %s24, 1
      %p189 = por %p187, %p188
      %p190 = scmp.ne.s32.totalorder %s182, %s185
      %p191 = scmp.eq.s32.totalorder %s24, 0
      %p192 = por %p190, %p191
      %p193 = scmp.ne.s32.totalorder %s182, %s185
      %p194 = scmp.eq.s32.totalorder %s29, 1
      %p195 = por %p193, %p194
      %p196 = scmp.ne.s32.totalorder %s185, %s186
      %p197 = scmp.eq.s32.totalorder %s29, 0
      %p198 = por %p196, %p197
      %p199 = scmp.ne.s32.totalorder %s185, %s186
      %p200 = scmp.eq.s32.totalorder %s30, 1
      %p201 = por %p199, %p200
      %p203 = scmp.ne.s32.totalorder %s186, %s202
      %p204 = scmp.eq.s32.totalorder %s30, 0
      %p205 = por %p203, %p204
      %p206 = scmp.le.s32.totalorder 1, %s24
      %p207 = scmp.lt.s32.totalorder %s24, 3
      %p208 = pnand %p206, %p207
      %p209 = pneg %p208
      // Predicated region
      $region9: #{tpu_custom_call.1} parent=5 // pred_check
        _
      $region10: #{tpu_custom_call.1} parent=5 // pred_check_branch
        %211 = sbr.rel (%p208) target = $region12
      $region11: #{tpu_custom_call.1} parent=5 // pred_region
        %s212 = ssub.s32 %s24, 1
      $region12: #{tpu_custom_call.1} parent=5 // pred_fallthru
        _
      %p213 = scmp.lt.s32.totalorder %s24, 2
      // Predicated region
      $region13: #{tpu_custom_call.1} parent=5 // pred_check
        %p214 = pneg %p213
      $region14: #{tpu_custom_call.1} parent=5 // pred_check_branch
        %216 = sbr.rel (%p214) target = $region16
      $region15: #{tpu_custom_call.1} parent=5 // pred_region
        // Predicated region
        $region17: #{tpu_custom_call.1} parent=15 // pred_check
          %p217 = pneg %p58
        $region18: #{tpu_custom_call.1} parent=15 // pred_check_branch
          %219 = sbr.rel (%p217) target = $region20
        $region19: #{tpu_custom_call.1} parent=15 // pred_region
          %s220 = sand.u32 %s48, 1
          %s221 = scalar_lea.sflag [#allocation3], %s220
          %s222 = sand.u32 %s48, 1
          %s223 = smul.addr %s222, 64
          %s224 = scalar_lea.vmem [#allocation2], %s223
          %s225 = smul.u32 2, %s32
          %s227 = ssub.s32 1024, 1024
          %228 = vsyncadd %s221, %s227
          %s229 = smul.addr %s31, 8
          %s230 = sadd.s32 %s225, %s229
          %s231 = smul.addr %s230, 128
          %s232 = scalar_lea.hbm %s0, %s231
          %s233 = sshll.u32 %s224, 4
          %s234 = int_to_ptr.vmem [resolvable:$true] %s233
          %239 = dma.hbm_to_vmem [thread:$0]  %s232, 1024, %s234, %s221, 128, 128, 8
        $region20: #{tpu_custom_call.1} parent=15 // pred_fallthru
          _
        // Predicated region
        $region21: #{tpu_custom_call.1} parent=15 // pred_check
          %p240 = pneg %p86
        $region22: #{tpu_custom_call.1} parent=15 // pred_check_branch
          %242 = sbr.rel (%p240) target = $region24
        $region23: #{tpu_custom_call.1} parent=15 // pred_region
          %s243 = sand.u32 %s24, 1
          %s244 = scalar_lea.sflag [#allocation6], %s243
          %s245 = sand.u32 %s76, 1
          %s246 = smul.addr %s245, 16
          %s247 = scalar_lea.vmem [#allocation5], %s246
          %s248 = smul.u32 2, %s32
          %s250 = ssub.s32 256, 256
          %251 = vsyncadd %s244, %s250
          %s252 = smul.addr %s31, 2
          %s253 = sadd.s32 %s248, %s252
          %s254 = smul.addr %s253, 128
          %s255 = scalar_lea.hbm %s1, %s254
          %s256 = sshll.u32 %s247, 4
          %s257 = int_to_ptr.vmem [resolvable:$true] %s256
          %262 = dma.hbm_to_vmem [thread:$0]  %s255, 256, %s257, %s244, 128, 128, 8
        $region24: #{tpu_custom_call.1} parent=15 // pred_fallthru
          _
        // Predicated region
        $region25: #{tpu_custom_call.1} parent=15 // pred_check
          %p263 = pneg %p114
        $region26: #{tpu_custom_call.1} parent=15 // pred_check_branch
          %265 = sbr.rel (%p263) target = $region28
        $region27: #{tpu_custom_call.1} parent=15 // pred_region
          %s266 = sand.u32 %s24, 1
          %s267 = scalar_lea.sflag [#allocation6], %s266
          %s268 = sand.u32 %s104, 1
          %s269 = smul.addr %s268, 16
          %s270 = scalar_lea.vmem [#allocation7], %s269
          %s271 = smul.u32 2, %s32
          %s273 = ssub.s32 256, 256
          %274 = vsyncadd %s267, %s273
          %s275 = smul.addr %s31, 2
          %s276 = sadd.s32 %s271, %s275
          %s277 = smul.addr %s276, 128
          %s278 = scalar_lea.hbm %s2, %s277
          %s279 = sshll.u32 %s270, 4
          %s280 = int_to_ptr.vmem [resolvable:$true] %s279
          %285 = dma.hbm_to_vmem [thread:$0]  %s278, 256, %s280, %s267, 128, 128, 8
        $region28: #{tpu_custom_call.1} parent=15 // pred_fallthru
          _
      $region16: #{tpu_custom_call.1} parent=5 // pred_fallthru
        _
      %p286 = scmp.le.s32.totalorder 1, %s24
      %p287 = scmp.lt.s32.totalorder %s24, 3
      %p288 = pnand %p286, %p287
      %p289 = pneg %p288
      // Predicated region
      $region29: #{tpu_custom_call.1} parent=5 // pred_check
        _
      $region30: #{tpu_custom_call.1} parent=5 // pred_check_branch
        %291 = sbr.rel (%p288) target = $region32
      $region31: #{tpu_custom_call.1} parent=5 // pred_region
        %s292 = ssub.s32 %s24, 1
        %s293 = sand.u32 %s51, 1
        %s294 = scalar_lea.sflag [#allocation3], %s293
        %s295 = sand.u32 %s51, 1
        %s296 = smul.addr %s295, 64
        %s297 = scalar_lea.vmem [#allocation2], %s296
        // Predicated region
        $region33: #{tpu_custom_call.1} parent=31 // pred_check
          %p298 = pneg %p64
        $region34: #{tpu_custom_call.1} parent=31 // pred_check_branch
          %300 = sbr.rel (%p298) target = $region36
        $region35: #{tpu_custom_call.1} parent=31 // pred_region
          %301 = dma.done %s294, 1024
        $region36: #{tpu_custom_call.1} parent=31 // pred_fallthru
          _
        %s302 = sand.u32 %s29, 1
        %s303 = scalar_lea.sflag [#allocation6], %s302
        %s304 = sand.u32 %s79, 1
        %s305 = smul.addr %s304, 16
        %s306 = scalar_lea.vmem [#allocation5], %s305
        // Predicated region
        $region37: #{tpu_custom_call.1} parent=31 // pred_check
          %p307 = pneg %p92
        $region38: #{tpu_custom_call.1} parent=31 // pred_check_branch
          %309 = sbr.rel (%p307) target = $region40
        $region39: #{tpu_custom_call.1} parent=31 // pred_region
          %310 = dma.done %s303, 256
        $region40: #{tpu_custom_call.1} parent=31 // pred_fallthru
          _
        %s311 = sand.u32 %s29, 1
        %s312 = scalar_lea.sflag [#allocation6], %s311
        %s313 = sand.u32 %s107, 1
        %s314 = smul.addr %s313, 16
        %s315 = scalar_lea.vmem [#allocation7], %s314
        // Predicated region
        $region41: #{tpu_custom_call.1} parent=31 // pred_check
          %p316 = pneg %p120
        $region42: #{tpu_custom_call.1} parent=31 // pred_check_branch
          %318 = sbr.rel (%p316) target = $region44
        $region43: #{tpu_custom_call.1} parent=31 // pred_region
          %319 = dma.done %s312, 256
        $region44: #{tpu_custom_call.1} parent=31 // pred_fallthru
          _
        %s320 = sand.u32 %s51, 1
        %s321 = scalar_lea.sflag [#allocation3], %s320
        %s322 = sand.u32 %s51, 1
        %s323 = smul.addr %s322, 64
        %s324 = scalar_lea.vmem [#allocation2], %s323
        %p325 = pneg %p64
        %p326 = pneg %p61
        %s327 = sand.u32 %s29, 1
        %s328 = scalar_lea.sflag [#allocation6], %s327
        %s329 = sand.u32 %s79, 1
        %s330 = smul.addr %s329, 16
        %s331 = scalar_lea.vmem [#allocation5], %s330
        %p332 = pneg %p92
        %p333 = pneg %p89
        %s334 = sand.u32 %s29, 1
        %s335 = scalar_lea.sflag [#allocation6], %s334
        %s336 = sand.u32 %s107, 1
        %s337 = smul.addr %s336, 16
        %s338 = scalar_lea.vmem [#allocation7], %s337
        %p339 = pneg %p120
        %p340 = pneg %p117
        %p341 = pneg %p146
        %p342 = pneg %p143
        %s343 = sand.u32 %s133, 1
        %s344 = scalar_lea.sflag [#allocation4], %s343
        %s345 = sand.u32 %s133, 1
        %s346 = smul.addr %s345, 32
        %s347 = scalar_lea.vmem [#allocation8], %s346
        %p348 = pneg %p172
        %p349 = pneg %p169
        %s350 = sand.u32 %s29, 1
        %s351 = scalar_lea.sflag [#allocation10], %s350
        %s352 = sand.u32 %s159, 1
        %s353 = smul.addr %s352, 32
        %s354 = scalar_lea.vmem [#allocation9], %s353
        %p355 = pneg %p198
        %p356 = pneg %p195
        %s357 = sand.u32 %s29, 1
        %s358 = scalar_lea.sflag [#allocation10], %s357
        %s359 = sand.u32 %s185, 1
        %s360 = smul.addr %s359, 32
        %s361 = scalar_lea.vmem [#allocation11], %s360
        %s362 = smul.u32 2, %s34
        %s363 = smul.u32 2, %s34
        %s364 = smul.u32 2, %s34
        %p365 = scmp.eq.s32.totalorder %s34, 0
        // Predicated region
        $region45: #{tpu_custom_call.1} parent=31 // pred_check
          %p366 = pneg %p365
        $region46: #{tpu_custom_call.1} parent=31 // pred_check_branch
          %368 = sbr.rel (%p366) target = $region48
        $region47: #{tpu_custom_call.1} parent=31 // pred_region
          %369 = vst [vmem:[%s347] sm:$0xff] 0.0
          %370 = vst [vmem:[%s347 + $0x8] sm:$0xff] 0.0
          %371 = vst [vmem:[%s347 + $0x10] sm:$0xff] 0.0
          %372 = vst [vmem:[%s347 + $0x18] sm:$0xff] 0.0
          %373 = vst [vmem:[%s354] sm:$0xff] 0.0
          %374 = vst [vmem:[%s354 + $0x8] sm:$0xff] 0.0
          %375 = vst [vmem:[%s354 + $0x10] sm:$0xff] 0.0
          %376 = vst [vmem:[%s354 + $0x18] sm:$0xff] 0.0
          %377 = vst [vmem:[%s361] sm:$0xff] 0.0
          %378 = vst [vmem:[%s361 + $0x8] sm:$0xff] 0.0
          %379 = vst [vmem:[%s361 + $0x10] sm:$0xff] 0.0
          %380 = vst [vmem:[%s361 + $0x18] sm:$0xff] 0.0
        $region48: #{tpu_custom_call.1} parent=31 // pred_fallthru
          _
        %v381 = vld [vmem:[%s306] sm:$0xff]
        %v382 = vld [vmem:[%s306 + $0x8] sm:$0xff]
        %v383 = vld [vmem:[%s315] sm:$0xff]
        %v384 = vld [vmem:[%s315 + $0x8] sm:$0xff]
        %v385 = vld [vmem:[%s297] sm:$0xff]
        %v386 = vld [vmem:[%s297 + $0x8] sm:$0xff]
        %vm387 = vcmp.eq.s32.totalorder %v381, 0
        %vm388 = vcmp.eq.s32.totalorder %v382, 0
        %v389 = vmul.f32 %v385, %v383
        %v390 = vmul.f32 %v386, %v384
        %v391 = vld [vmem:[%s347] sm:$0xff]
        %v392 = vsel %vm387, %v389, 0.0
        %v393 = vsel %vm388, %v390, 0.0
        %v394 = vadd.f32 %v392, %v393
        %v395 = vadd.f32 %v391, %v394
        %396 = vst [vmem:[%s347] sm:$0xff] %v395
        %v397 = vld [vmem:[%s354] sm:$0xff]
        %v398 = vadd.f32 %v389, %v390
        %v399 = vadd.f32 %v397, %v398
        %400 = vst [vmem:[%s354] sm:$0xff] %v399
        %v401 = vld [vmem:[%s361] sm:$0xff]
        %v402 = vsel %vm387, %v383, 0.0
        %v403 = vsel %vm388, %v384, 0.0
        %v404 = vadd.f32 %v402, %v403
        %v405 = vadd.f32 %v401, %v404
        %406 = vst [vmem:[%s361] sm:$0xff] %v405
        %s407 = scalar_lea.vmem %s297, 16 [#allocation2]
        %v408 = vld [vmem:[%s407] sm:$0xff]
        %v409 = vld [vmem:[%s407 + $0x8] sm:$0xff]
        %vm410 = vcmp.eq.s32.totalorder %v381, 1
        %vm411 = vcmp.eq.s32.totalorder %v382, 1
        %v412 = vmul.f32 %v408, %v383
        %v413 = vmul.f32 %v409, %v384
        %s414 = scalar_lea.vmem %s347, 8 [#allocation8]
        %v415 = vld [vmem:[%s414] sm:$0xff]
        %v416 = vsel %vm410, %v412, 0.0
        %v417 = vsel %vm411, %v413, 0.0
        %v418 = vadd.f32 %v416, %v417
        %v419 = vadd.f32 %v415, %v418
        %420 = vst [vmem:[%s414] sm:$0xff] %v419
        %s421 = scalar_lea.vmem %s354, 8 [#allocation9]
        %v422 = vld [vmem:[%s421] sm:$0xff]
        %v423 = vadd.f32 %v412, %v413
        %v424 = vadd.f32 %v422, %v423
        %425 = vst [vmem:[%s421] sm:$0xff] %v424
        %s426 = scalar_lea.vmem %s361, 8 [#allocation11]
        %v427 = vld [vmem:[%s426] sm:$0xff]
        %v428 = vsel %vm410, %v383, 0.0
        %v429 = vsel %vm411, %v384, 0.0
        %v430 = vadd.f32 %v428, %v429
        %v431 = vadd.f32 %v427, %v430
        %432 = vst [vmem:[%s426] sm:$0xff] %v431
        %s433 = scalar_lea.vmem %s297, 32 [#allocation2]
        %v434 = vld [vmem:[%s433] sm:$0xff]
        %v435 = vld [vmem:[%s433 + $0x8] sm:$0xff]
        %vm436 = vcmp.eq.s32.totalorder %v381, 2
        %vm437 = vcmp.eq.s32.totalorder %v382, 2
        %v438 = vmul.f32 %v434, %v383
        %v439 = vmul.f32 %v435, %v384
        %s440 = scalar_lea.vmem %s347, 16 [#allocation8]
        %v441 = vld [vmem:[%s440] sm:$0xff]
        %v442 = vsel %vm436, %v438, 0.0
        %v443 = vsel %vm437, %v439, 0.0
        %v444 = vadd.f32 %v442, %v443
        %v445 = vadd.f32 %v441, %v444
        %446 = vst [vmem:[%s440] sm:$0xff] %v445
        %s447 = scalar_lea.vmem %s354, 16 [#allocation9]
        %v448 = vld [vmem:[%s447] sm:$0xff]
        %v449 = vadd.f32 %v438, %v439
        %v450 = vadd.f32 %v448, %v449
        %451 = vst [vmem:[%s447] sm:$0xff] %v450
        %s452 = scalar_lea.vmem %s361, 16 [#allocation11]
        %v453 = vld [vmem:[%s452] sm:$0xff]
        %v454 = vsel %vm436, %v383, 0.0
        %v455 = vsel %vm437, %v384, 0.0
        %v456 = vadd.f32 %v454, %v455
        %v457 = vadd.f32 %v453, %v456
        %458 = vst [vmem:[%s452] sm:$0xff] %v457
        %s459 = scalar_lea.vmem %s297, 48 [#allocation2]
        %v460 = vld [vmem:[%s459] sm:$0xff]
        %v461 = vld [vmem:[%s459 + $0x8] sm:$0xff]
        %vm462 = vcmp.eq.s32.totalorder %v381, 3
        %vm463 = vcmp.eq.s32.totalorder %v382, 3
        %v464 = vmul.f32 %v460, %v383
        %v465 = vmul.f32 %v461, %v384
        %s466 = scalar_lea.vmem %s347, 24 [#allocation8]
        %v467 = vld [vmem:[%s466] sm:$0xff]
        %v468 = vsel %vm462, %v464, 0.0
        %v469 = vsel %vm463, %v465, 0.0
        %v470 = vadd.f32 %v468, %v469
        %v471 = vadd.f32 %v467, %v470
        %472 = vst [vmem:[%s466] sm:$0xff] %v471
        %s473 = scalar_lea.vmem %s354, 24 [#allocation9]
        %v474 = vld [vmem:[%s473] sm:$0xff]
        %v475 = vadd.f32 %v464, %v465
        %v476 = vadd.f32 %v474, %v475
        %477 = vst [vmem:[%s473] sm:$0xff] %v476
        %s478 = scalar_lea.vmem %s361, 24 [#allocation11]
        %v479 = vld [vmem:[%s478] sm:$0xff]
        %v480 = vsel %vm462, %v383, 0.0
        %v481 = vsel %vm463, %v384, 0.0
        %v482 = vadd.f32 %v480, %v481
        %v483 = vadd.f32 %v479, %v482
        %484 = vst [vmem:[%s478] sm:$0xff] %v483
        %s485 = sand.u32 %s133, 1
        %s486 = scalar_lea.sflag [#allocation4], %s485
        %s487 = sand.u32 %s133, 1
        %s488 = smul.addr %s487, 32
        %s489 = scalar_lea.vmem [#allocation8], %s488
        %s490 = sand.u32 %s29, 1
        %s491 = scalar_lea.sflag [#allocation10], %s490
        %s492 = sand.u32 %s159, 1
        %s493 = smul.addr %s492, 32
        %s494 = scalar_lea.vmem [#allocation9], %s493
        %s495 = sand.u32 %s29, 1
        %s496 = scalar_lea.sflag [#allocation10], %s495
        %s497 = sand.u32 %s185, 1
        %s498 = smul.addr %s497, 32
        %s499 = scalar_lea.vmem [#allocation11], %s498
        // Predicated region
        $region49: #{tpu_custom_call.1} parent=31 // pred_check
          %p500 = pneg %p143
        $region50: #{tpu_custom_call.1} parent=31 // pred_check_branch
          %502 = sbr.rel (%p500) target = $region52
        $region51: #{tpu_custom_call.1} parent=31 // pred_region
          %s504 = ssub.s32 512, 512
          %505 = vsyncadd %s486, %s504
          %s506 = smul.addr %s33, 4
          %s507 = smul.addr %s506, 128
          %s508 = scalar_lea.hbm %s3, %s507
          %s509 = sshll.u32 %s489, 4
          %s510 = int_to_ptr.vmem [resolvable:$true] %s509
          %515 = dma.vmem_to_hbm [thread:$0]  %s510, 512, %s508, %s486, 128, 128, 8
        $region52: #{tpu_custom_call.1} parent=31 // pred_fallthru
          _
        // Predicated region
        $region53: #{tpu_custom_call.1} parent=31 // pred_check
          %p516 = pneg %p169
        $region54: #{tpu_custom_call.1} parent=31 // pred_check_branch
          %518 = sbr.rel (%p516) target = $region56
        $region55: #{tpu_custom_call.1} parent=31 // pred_region
          %s520 = ssub.s32 512, 512
          %521 = vsyncadd %s491, %s520
          %s522 = smul.addr %s33, 4
          %s523 = smul.addr %s522, 128
          %s524 = scalar_lea.hbm %s4, %s523
          %s525 = sshll.u32 %s494, 4
          %s526 = int_to_ptr.vmem [resolvable:$true] %s525
          %531 = dma.vmem_to_hbm [thread:$0]  %s526, 512, %s524, %s491, 128, 128, 8
        $region56: #{tpu_custom_call.1} parent=31 // pred_fallthru
          _
        // Predicated region
        $region57: #{tpu_custom_call.1} parent=31 // pred_check
          %p532 = pneg %p195
        $region58: #{tpu_custom_call.1} parent=31 // pred_check_branch
          %534 = sbr.rel (%p532) target = $region60
        $region59: #{tpu_custom_call.1} parent=31 // pred_region
          %s536 = ssub.s32 512, 512
          %537 = vsyncadd %s496, %s536
          %s538 = smul.addr %s33, 4
          %s539 = smul.addr %s538, 128
          %s540 = scalar_lea.hbm %s5, %s539
          %s541 = sshll.u32 %s499, 4
          %s542 = int_to_ptr.vmem [resolvable:$true] %s541
          %547 = dma.vmem_to_hbm [thread:$0]  %s542, 512, %s540, %s496, 128, 128, 8
        $region60: #{tpu_custom_call.1} parent=31 // pred_fallthru
          _
      $region32: #{tpu_custom_call.1} parent=5 // pred_fallthru
        _
      %p548 = scmp.le.s32.totalorder 2, %s24
      // Predicated region
      $region61: #{tpu_custom_call.1} parent=5 // pred_check
        %p549 = pneg %p548
      $region62: #{tpu_custom_call.1} parent=5 // pred_check_branch
        %551 = sbr.rel (%p549) target = $region64
      $region63: #{tpu_custom_call.1} parent=5 // pred_region
        %s552 = ssub.s32 %s24, 2
        // Predicated region
        $region65: #{tpu_custom_call.1} parent=63 // pred_check
          %p553 = pneg %p149
        $region66: #{tpu_custom_call.1} parent=63 // pred_check_branch
          %555 = sbr.rel (%p553) target = $region68
        $region67: #{tpu_custom_call.1} parent=63 // pred_region
          %s556 = sand.u32 %s134, 1
          %s557 = scalar_lea.sflag [#allocation4], %s556
          %s558 = sand.u32 %s134, 1
          %s559 = smul.addr %s558, 32
          %s560 = scalar_lea.vmem [#allocation8], %s559
          %561 = dma.done %s557, 512
        $region68: #{tpu_custom_call.1} parent=63 // pred_fallthru
          _
        // Predicated region
        $region69: #{tpu_custom_call.1} parent=63 // pred_check
          %p562 = pneg %p175
        $region70: #{tpu_custom_call.1} parent=63 // pred_check_branch
          %564 = sbr.rel (%p562) target = $region72
        $region71: #{tpu_custom_call.1} parent=63 // pred_region
          %s565 = sand.u32 %s30, 1
          %s566 = scalar_lea.sflag [#allocation10], %s565
          %s567 = sand.u32 %s160, 1
          %s568 = smul.addr %s567, 32
          %s569 = scalar_lea.vmem [#allocation9], %s568
          %570 = dma.done %s566, 512
        $region72: #{tpu_custom_call.1} parent=63 // pred_fallthru
          _
        // Predicated region
        $region73: #{tpu_custom_call.1} parent=63 // pred_check
          %p571 = pneg %p201
        $region74: #{tpu_custom_call.1} parent=63 // pred_check_branch
          %573 = sbr.rel (%p571) target = $region76
        $region75: #{tpu_custom_call.1} parent=63 // pred_region
          %s574 = sand.u32 %s30, 1
          %s575 = scalar_lea.sflag [#allocation10], %s574
          %s576 = sand.u32 %s186, 1
          %s577 = smul.addr %s576, 32
          %s578 = scalar_lea.vmem [#allocation11], %s577
          %579 = dma.done %s575, 512
        $region76: #{tpu_custom_call.1} parent=63 // pred_fallthru
          _
      $region64: #{tpu_custom_call.1} parent=5 // pred_fallthru
        _
    $region6: #{tpu_custom_call.1} parent=1 // loop_footer
      %s28 = sadd.s32 1, %s24
    $region7: #{tpu_custom_call.1} parent=1 // loop_footer_branch
      %23 = sbr.rel target = $region3
    $region8: #{tpu_custom_call.1} parent=1 // loop_exit
      _
    %580 = vsyncpa [#allocation3], 1
    %s581 = scalar_lea.sflag [#allocation3], 1
    %582 = vsyncpa %s581, 1
    %583 = vsyncpa [#allocation6], 1
    %s584 = scalar_lea.sflag [#allocation6], 1
    %585 = vsyncpa %s584, 1
    %586 = vsyncpa [#allocation4], 1
    %s587 = scalar_lea.sflag [#allocation4], 1
    %588 = vsyncpa %s587, 1
    %589 = vsyncpa [#allocation10], 1
    %s590 = scalar_lea.sflag [#allocation10], 1
    %591 = vsyncpa %s590, 1

</llo_original>
